<compile_context>
chip_gen: v5e
topology: v5e:2x2
jax: 0.10.0
libtpu: 0.0.40
codegen_flags: <defaults>
</compile_context>

<pallas_src>
import jax
import jax.numpy as jnp
from jax.experimental import pallas as pl
from jax.experimental.pallas import tpu as pltpu

LANE = 128                    # vreg lane width: all layer widths padded to this
DIMS = [64, 32, 16, 8, 4, 2]  # true output widths of fc1..fc6


# ----------------------------------------------------------------------------
# Pallas kernel: whole MLP hot path (6 matmuls + 5 ReLUs) for one batch tile
# ----------------------------------------------------------------------------
def banknet_kernel(x_ref, w1_ref, wrest_ref, b_ref, o_ref):
    # x_ref:     (tb, F_in)        bf16
    # w1_ref:    (F_in, 128)       bf16 (fc1, output zero-padded to 128)
    # wrest_ref: (5, 128, 128)     bf16 (fc2..fc6, zero-padded to 128x128)
    # b_ref:     (6, 128)          f32  (biases, zero-padded to 128)
    # o_ref:     (tb, 128)         bf16 (only columns [:2] are meaningful)
    x = x_ref[...]                                            # bf16 operands
    h = jnp.dot(x, w1_ref[...], preferred_element_type=jnp.float32)
    # bias + relu in f32, then immediately drop to bf16 so the inter-layer
    # activation that lives in VMEM between matmuls is 2 bytes/elem.
    h = jnp.maximum(h + b_ref[0:1, :], 0.0).astype(jnp.bfloat16)

    for i in range(4):                                        # fc2..fc5
        h = jnp.dot(h, wrest_ref[i], preferred_element_type=jnp.float32)
        h = jnp.maximum(h + b_ref[i + 1:i + 2, :], 0.0).astype(jnp.bfloat16)

    # fc6: no ReLU. Store bf16, 128 lanes wide -> unmasked vst, half the
    # HBM writeback of the previous f32 output.
    h = jnp.dot(h, wrest_ref[4], preferred_element_type=jnp.float32)
    o_ref[...] = (h + b_ref[5:6, :]).astype(jnp.bfloat16)


# ----------------------------------------------------------------------------
# Wrapper: flatten input, pad/pack weights to lane width, tile over batch.
# ----------------------------------------------------------------------------
def _round_up(n, m):
    return ((n + m - 1) // m) * m


def _pack_params(params, f_in):
    """Pad all layers to 128 lanes (zeros) and pack into 3 arrays."""
    assert len(params) == 6, "BankNet has exactly 6 linear layers"
    in_dims = [f_in] + DIMS[:-1]
    for li, (w, b) in enumerate(params):
        assert w.shape == (in_dims[li], DIMS[li]), (
            f"fc{li+1} weight shape {w.shape} != {(in_dims[li], DIMS[li])}")
        assert b.shape == (DIMS[li],), (
            f"fc{li+1} bias shape {b.shape} != {(DIMS[li],)}")

    (w1, _) = params[0]
    w1p = jnp.zeros((f_in, LANE), jnp.bfloat16)
    w1p = w1p.at[:, :DIMS[0]].set(w1.astype(jnp.bfloat16))

    wrest = []
    for li in range(1, 6):
        w, _ = params[li]
        k, n = w.shape
        wp = jnp.zeros((LANE, LANE), jnp.bfloat16)
        wp = wp.at[:k, :n].set(w.astype(jnp.bfloat16))
        wrest.append(wp)
    wrest = jnp.stack(wrest, axis=0)                          # (5, 128, 128)

    bias = jnp.zeros((6, LANE), jnp.float32)
    for li in range(6):
        bias = bias.at[li, :DIMS[li]].set(params[li][1].astype(jnp.float32))
    return w1p, wrest, bias


def _choose_tile(B, tile_b=4096):
    """Pick the batch-tile size.

    - B <= 1024: single grid step, rounded only to the 16-row bf16 sublane
      granularity (no padding batch=2 to hundreds of rows).
    - 1024 < B <= tile_b: two grid steps so both v7x TensorCores get work.
    - B > tile_b: ~tile_b-row tiles, sized from the number of slices so the
      last-tile padding stays small.
    Per-tile VMEM at tb=4096 (x 128 KiB x2, out bf16 1 MiB x2, h ~1-2 MiB,
    weights ~0.4 MiB) is well inside every generation's scoped VMEM.
    """
    if B <= 1024:
        return _round_up(max(B, 16), 16)
    if B <= tile_b:
        return _round_up((B + 1) // 2, 256)          # exactly 2 grid steps
    n = pl.cdiv(B, tile_b)
    return _round_up(pl.cdiv(B, n), 256)


def banknet_forward(x, params, *, tile_b=4096):
    # torch.flatten(x, 1)
    B = x.shape[0]
    x2 = x.reshape(B, -1)
    F_in = x2.shape[1]

    tb = _choose_tile(B, tile_b)
    Bp = _round_up(B, tb)
    if Bp != B:
        x2 = jnp.pad(x2, ((0, Bp - B), (0, 0)))
    x2 = x2.astype(jnp.bfloat16)

    w1p, wrest, bias = _pack_params(params, F_in)

    grid = (Bp // tb,)

    flops = 2 * Bp * (F_in * LANE + 5 * LANE * LANE)
    bytes_accessed = (Bp * F_in * 2            # x stream (bf16)
                      + Bp * LANE * 2          # padded output (bf16)
                      + w1p.size * 2 + wrest.size * 2 + bias.size * 4)

    out = pl.pallas_call(
        banknet_kernel,
        out_shape=jax.ShapeDtypeStruct((Bp, LANE), jnp.bfloat16),
        grid_spec=pltpu.PrefetchScalarGridSpec(
            num_scalar_prefetch=0,
            grid=grid,
            in_specs=[
                pl.BlockSpec((tb, F_in), lambda i: (i, 0)),          # x tile
                pl.BlockSpec((F_in, LANE), lambda i: (0, 0)),        # fc1 weight
                pl.BlockSpec((5, LANE, LANE), lambda i: (0, 0, 0)),  # fc2..6 slab
                pl.BlockSpec((6, LANE), lambda i: (0, 0)),           # biases slab
            ],
            out_specs=pl.BlockSpec((tb, LANE), lambda i: (i, 0)),
        ),
        compiler_params=pltpu.CompilerParams(
            dimension_semantics=("parallel",),
            vmem_limit_bytes=32 * 1024 * 1024),
        cost_estimate=pl.CostEstimate(
            flops=flops, transcendentals=0, bytes_accessed=bytes_accessed),
    )(x2, w1p, wrest, bias)

    # drop batch padding and the zero-padded output lanes; return f32
    return out[:B, :DIMS[-1]].astype(jnp.float32)


# ----------------------------------------------------------------------------
# Deterministic parameter init (PyTorch nn.Linear-style uniform bounds)
# ----------------------------------------------------------------------------
def init_params(key, num_of_features):
    dims = [num_of_features] + DIMS
    params = []
    for i in range(6):
        fan_in, fan_out = dims[i], dims[i + 1]
        key, kw, kb = jax.random.split(key, 3)
        bound = 1.0 / (fan_in ** 0.5)
        # stored as (in, out): transpose of PyTorch's (out, in)
        w = jax.random.uniform(kw, (fan_in, fan_out), jnp.float32, -bound, bound)
        b = jax.random.uniform(kb, (fan_out,), jnp.float32, -bound, bound)
        params.append((w, b))
    return params


def reference_forward(x, params):
    h = x.reshape(x.shape[0], -1)
    for i, (w, b) in enumerate(params):
        h = h @ w + b
        if i < 5:
            h = jnp.maximum(h, 0.0)
    return h


if __name__ == "__main__":
    key = jax.random.PRNGKey(0)
    k_x, k_p = jax.random.split(key)

    num_of_features = 16          # small bank-dataset-like feature count
    batch = 2
    x = jax.random.normal(k_x, (batch, num_of_features), jnp.float32)

    params = init_params(k_p, num_of_features)

    out = jax.block_until_ready(banknet_forward(x, params))
    ref = reference_forward(x, params)

    assert out.shape == (batch, 2)
    # bf16 MXU operands / activations / output vs f32 reference -> relaxed tol
    assert jnp.allclose(out, ref, atol=5e-2, rtol=5e-2), "mismatch vs reference"

    print("KERNEL_OK")
</pallas_src>

<mosaic_0001>
module attributes {stable_mosaic.version = 11 : i64} {
  func.func @banknet_kernel(%arg0: i32, %arg1: memref<16x16xbf16, #tpu.memory_space<vmem>>, %arg2: memref<16x128xbf16, #tpu.memory_space<vmem>>, %arg3: memref<5x128x128xbf16, #tpu.memory_space<vmem>>, %arg4: memref<6x128xf32, #tpu.memory_space<vmem>>, %arg5: memref<16x128xbf16, #tpu.memory_space<vmem>>) attributes {dimension_semantics = [#tpu.dimension_semantics<parallel>], iteration_bounds = array<i64: 1>, scalar_prefetch = 0 : i64, scratch_operands = 0 : i64, tpu.core_type = #tpu.core_type<tc>, window_params = [{transform_indices = @transform_0, window_bounds = array<i64: 16, 16>}, {pipeline_mode = #tpu.pipeline_mode<synchronous>, transform_indices = @transform_1, window_bounds = array<i64: 16, 128>}, {pipeline_mode = #tpu.pipeline_mode<synchronous>, transform_indices = @transform_2, window_bounds = array<i64: 5, 128, 128>}, {pipeline_mode = #tpu.pipeline_mode<synchronous>, transform_indices = @transform_3, window_bounds = array<i64: 6, 128>}, {transform_indices = @transform_4, window_bounds = array<i64: 16, 128>}]} {
    %c0 = arith.constant 0 : index
    %c0_0 = arith.constant 0 : index
    %0 = vector.load %arg1[%c0, %c0_0] : memref<16x16xbf16, #tpu.memory_space<vmem>>, vector<16x16xbf16>
    %c0_1 = arith.constant 0 : index
    %c0_2 = arith.constant 0 : index
    %1 = vector.load %arg2[%c0_1, %c0_2] : memref<16x128xbf16, #tpu.memory_space<vmem>>, vector<16x128xbf16>
    %cst = arith.constant dense<0.000000e+00> : vector<16x128xf32>
    %2 = tpu.matmul %0, %1, %cst {dimension_numbers = #tpu.dot_dimension_numbers<[1], [0], [0], [1], [0, 0, 1, 1], [], []>} : vector<16x16xbf16>, vector<16x128xbf16>, vector<16x128xf32> -> vector<16x128xf32>
    %c0_3 = arith.constant 0 : index
    %c0_4 = arith.constant 0 : index
    %3 = vector.load %arg4[%c0_3, %c0_4] : memref<6x128xf32, #tpu.memory_space<vmem>>, vector<1x128xf32>
    %4 = vector.broadcast %3 : vector<1x128xf32> to vector<16x128xf32>
    %5 = arith.addf %2, %4 : vector<16x128xf32>
    %cst_5 = arith.constant 0.000000e+00 : f32
    %6 = vector.broadcast %cst_5 : f32 to vector<16x128xf32>
    %7 = arith.maximumf %5, %6 : vector<16x128xf32>
    %8 = arith.truncf %7 : vector<16x128xf32> to vector<16x128xbf16>
    %c0_6 = arith.constant 0 : index
    %c0_7 = arith.constant 0 : index
    %c0_8 = arith.constant 0 : index
    %9 = vector.load %arg3[%c0_6, %c0_7, %c0_8] : memref<5x128x128xbf16, #tpu.memory_space<vmem>>, vector<1x128x128xbf16>
    %10 = vector.shape_cast %9 : vector<1x128x128xbf16> to vector<128x128xbf16>
    %cst_9 = arith.constant dense<0.000000e+00> : vector<16x128xf32>
    %11 = tpu.matmul %8, %10, %cst_9 {dimension_numbers = #tpu.dot_dimension_numbers<[1], [0], [0], [1], [0, 0, 1, 1], [], []>} : vector<16x128xbf16>, vector<128x128xbf16>, vector<16x128xf32> -> vector<16x128xf32>
    %c1 = arith.constant 1 : index
    %c0_10 = arith.constant 0 : index
    %12 = vector.load %arg4[%c1, %c0_10] : memref<6x128xf32, #tpu.memory_space<vmem>>, vector<1x128xf32>
    %13 = vector.broadcast %12 : vector<1x128xf32> to vector<16x128xf32>
    %14 = arith.addf %11, %13 : vector<16x128xf32>
    %cst_11 = arith.constant 0.000000e+00 : f32
    %15 = vector.broadcast %cst_11 : f32 to vector<16x128xf32>
    %16 = arith.maximumf %14, %15 : vector<16x128xf32>
    %17 = arith.truncf %16 : vector<16x128xf32> to vector<16x128xbf16>
    %c1_12 = arith.constant 1 : index
    %c0_13 = arith.constant 0 : index
    %c0_14 = arith.constant 0 : index
    %18 = vector.load %arg3[%c1_12, %c0_13, %c0_14] : memref<5x128x128xbf16, #tpu.memory_space<vmem>>, vector<1x128x128xbf16>
    %19 = vector.shape_cast %18 : vector<1x128x128xbf16> to vector<128x128xbf16>
    %cst_15 = arith.constant dense<0.000000e+00> : vector<16x128xf32>
    %20 = tpu.matmul %17, %19, %cst_15 {dimension_numbers = #tpu.dot_dimension_numbers<[1], [0], [0], [1], [0, 0, 1, 1], [], []>} : vector<16x128xbf16>, vector<128x128xbf16>, vector<16x128xf32> -> vector<16x128xf32>
    %c2 = arith.constant 2 : index
    %c0_16 = arith.constant 0 : index
    %21 = vector.load %arg4[%c2, %c0_16] : memref<6x128xf32, #tpu.memory_space<vmem>>, vector<1x128xf32>
    %22 = vector.broadcast %21 : vector<1x128xf32> to vector<16x128xf32>
    %23 = arith.addf %20, %22 : vector<16x128xf32>
    %cst_17 = arith.constant 0.000000e+00 : f32
    %24 = vector.broadcast %cst_17 : f32 to vector<16x128xf32>
    %25 = arith.maximumf %23, %24 : vector<16x128xf32>
    %26 = arith.truncf %25 : vector<16x128xf32> to vector<16x128xbf16>
    %c2_18 = arith.constant 2 : index
    %c0_19 = arith.constant 0 : index
    %c0_20 = arith.constant 0 : index
    %27 = vector.load %arg3[%c2_18, %c0_19, %c0_20] : memref<5x128x128xbf16, #tpu.memory_space<vmem>>, vector<1x128x128xbf16>
    %28 = vector.shape_cast %27 : vector<1x128x128xbf16> to vector<128x128xbf16>
    %cst_21 = arith.constant dense<0.000000e+00> : vector<16x128xf32>
    %29 = tpu.matmul %26, %28, %cst_21 {dimension_numbers = #tpu.dot_dimension_numbers<[1], [0], [0], [1], [0, 0, 1, 1], [], []>} : vector<16x128xbf16>, vector<128x128xbf16>, vector<16x128xf32> -> vector<16x128xf32>
    %c3 = arith.constant 3 : index
    %c0_22 = arith.constant 0 : index
    %30 = vector.load %arg4[%c3, %c0_22] : memref<6x128xf32, #tpu.memory_space<vmem>>, vector<1x128xf32>
    %31 = vector.broadcast %30 : vector<1x128xf32> to vector<16x128xf32>
    %32 = arith.addf %29, %31 : vector<16x128xf32>
    %cst_23 = arith.constant 0.000000e+00 : f32
    %33 = vector.broadcast %cst_23 : f32 to vector<16x128xf32>
    %34 = arith.maximumf %32, %33 : vector<16x128xf32>
    %35 = arith.truncf %34 : vector<16x128xf32> to vector<16x128xbf16>
    %c3_24 = arith.constant 3 : index
    %c0_25 = arith.constant 0 : index
    %c0_26 = arith.constant 0 : index
    %36 = vector.load %arg3[%c3_24, %c0_25, %c0_26] : memref<5x128x128xbf16, #tpu.memory_space<vmem>>, vector<1x128x128xbf16>
    %37 = vector.shape_cast %36 : vector<1x128x128xbf16> to vector<128x128xbf16>
    %cst_27 = arith.constant dense<0.000000e+00> : vector<16x128xf32>
    %38 = tpu.matmul %35, %37, %cst_27 {dimension_numbers = #tpu.dot_dimension_numbers<[1], [0], [0], [1], [0, 0, 1, 1], [], []>} : vector<16x128xbf16>, vector<128x128xbf16>, vector<16x128xf32> -> vector<16x128xf32>
    %c4 = arith.constant 4 : index
    %c0_28 = arith.constant 0 : index
    %39 = vector.load %arg4[%c4, %c0_28] : memref<6x128xf32, #tpu.memory_space<vmem>>, vector<1x128xf32>
    %40 = vector.broadcast %39 : vector<1x128xf32> to vector<16x128xf32>
    %41 = arith.addf %38, %40 : vector<16x128xf32>
    %cst_29 = arith.constant 0.000000e+00 : f32
    %42 = vector.broadcast %cst_29 : f32 to vector<16x128xf32>
    %43 = arith.maximumf %41, %42 : vector<16x128xf32>
    %44 = arith.truncf %43 : vector<16x128xf32> to vector<16x128xbf16>
    %c4_30 = arith.constant 4 : index
    %c0_31 = arith.constant 0 : index
    %c0_32 = arith.constant 0 : index
    %45 = vector.load %arg3[%c4_30, %c0_31, %c0_32] : memref<5x128x128xbf16, #tpu.memory_space<vmem>>, vector<1x128x128xbf16>
    %46 = vector.shape_cast %45 : vector<1x128x128xbf16> to vector<128x128xbf16>
    %cst_33 = arith.constant dense<0.000000e+00> : vector<16x128xf32>
    %47 = tpu.matmul %44, %46, %cst_33 {dimension_numbers = #tpu.dot_dimension_numbers<[1], [0], [0], [1], [0, 0, 1, 1], [], []>} : vector<16x128xbf16>, vector<128x128xbf16>, vector<16x128xf32> -> vector<16x128xf32>
    %c5 = arith.constant 5 : index
    %c0_34 = arith.constant 0 : index
    %48 = vector.load %arg4[%c5, %c0_34] : memref<6x128xf32, #tpu.memory_space<vmem>>, vector<1x128xf32>
    %49 = vector.broadcast %48 : vector<1x128xf32> to vector<16x128xf32>
    %50 = arith.addf %47, %49 : vector<16x128xf32>
    %51 = arith.truncf %50 : vector<16x128xf32> to vector<16x128xbf16>
    %c0_35 = arith.constant 0 : index
    %c0_36 = arith.constant 0 : index
    %52 = vector.load %arg5[%c0_35, %c0_36] : memref<16x128xbf16, #tpu.memory_space<vmem>>, vector<16x128xbf16>
    tpu.vector_store %arg5[%c0_35, %c0_36], %51 {strides = array<i32>} : memref<16x128xbf16, #tpu.memory_space<vmem>>, vector<16x128xbf16>,
    return
  }
  func.func @transform_0(%arg0: i32) -> (i32, i32) {
    %c0_i32 = arith.constant 0 : i32
    %c0_i32_0 = arith.constant 0 : i32
    return %arg0, %c0_i32 : i32, i32
  }
  func.func @transform_1(%arg0: i32) -> (i32, i32) {
    %c0_i32 = arith.constant 0 : i32
    %c0_i32_0 = arith.constant 0 : i32
    %c0_i32_1 = arith.constant 0 : i32
    return %c0_i32, %c0_i32_0 : i32, i32
  }
  func.func @transform_2(%arg0: i32) -> (i32, i32, i32) {
    %c0_i32 = arith.constant 0 : i32
    %c0_i32_0 = arith.constant 0 : i32
    %c0_i32_1 = arith.constant 0 : i32
    %c0_i32_2 = arith.constant 0 : i32
    return %c0_i32, %c0_i32_0, %c0_i32_1 : i32, i32, i32
  }
  func.func @transform_3(%arg0: i32) -> (i32, i32) {
    %c0_i32 = arith.constant 0 : i32
    %c0_i32_0 = arith.constant 0 : i32
    %c0_i32_1 = arith.constant 0 : i32
    return %c0_i32, %c0_i32_0 : i32, i32
  }
  func.func @transform_4(%arg0: i32) -> (i32, i32) {
    %c0_i32 = arith.constant 0 : i32
    %c0_i32_0 = arith.constant 0 : i32
    return %arg0, %c0_i32 : i32, i32
  }
}

</mosaic_0001>

<llo_original>
// kernel: tpu_custom_call.1
$region0: #{tpu_custom_call.1}
  #allocation0 [shape = 'u32[]', space=smem, size = 0x4, offset = 0x4, fixed_abs, tag = 'smem constant byte address 0x4 - core index']
  #allocation1 [shape = 'u32[72,128]{1,0:T(1,128)}', space=vmem, size = 0x9000, scoped, tag = 'internal scratch']
  %s0 = inlined_call_operand.hbm [shape: bf16[16,16], index: 0, kind: input, shape index: {}]
  %s1 = inlined_call_operand.hbm [shape: bf16[16,128], index: 1, kind: input, shape index: {}]
  %s2 = inlined_call_operand.hbm [shape: bf16[5,128,128], index: 2, kind: input, shape index: {}]
  %s3 = inlined_call_operand.hbm [shape: f32[6,128], index: 3, kind: input, shape index: {}]
  %s4 = inlined_call_operand.hbm [shape: bf16[16,128], index: 4, kind: output, shape index: {}]
  %s5 = sld [smem:[#allocation0]]
  $region42: #{tpu_custom_call.1} parent=0
    _
  %s7 = ssub.s32 1, %s5
  %s8 = scalar_select 0, %s7, %s5
  $region1: #{tpu_custom_call.1} parent=0
    #allocation2 [shape = 'u8[4096]{0}', space=vmem, size = 0x1000, scoped, tag = 'input window, operand 0, single buffered']
    #allocation3 [shape = 's32[1]{0}', space=sflag, size = 0x4, scoped, tag = 'scoped memory for tpu_custom_call.1']
    #allocation4 [shape = 's32[1]{0}', space=sflag, size = 0x4, scoped, tag = 'scoped memory for tpu_custom_call.1']
    #allocation5 [shape = 'u8[4096]{0}', space=vmem, size = 0x1000, scoped, tag = 'input window, operand 1, single buffered']
    #allocation6 [shape = 's32[1]{0}', space=sflag, size = 0x4, scoped, tag = 'scoped memory for tpu_custom_call.1']
    #allocation7 [shape = 'u8[163840]{0}', space=vmem, size = 0x28000, scoped, tag = 'input window, operand 2, single buffered']
    #allocation8 [shape = 'u8[4096]{0}', space=vmem, size = 0x1000, scoped, tag = 'input window, operand 3, single buffered']
    #allocation9 [shape = 's32[1]{0}', space=sflag, size = 0x4, scoped, tag = 'scoped memory for tpu_custom_call.1']
    #allocation10 [shape = 'u8[4096]{0}', space=vmem, size = 0x1000, scoped, tag = 'output window, operand 0, single buffered']
    %9 = vsyncpa [#allocation3], 0
    %10 = vsyncpa [#allocation6], 0
    %11 = vsyncpa [#allocation9], 0
    %12 = vsyncpa [#allocation4], 0
    // Predicated region
    $region2: #{tpu_custom_call.1} parent=1 // pred_check
      _
    $region3: #{tpu_custom_call.1} parent=1 // pred_check_branch
      %14 = sbr.rel (0) target = $region5
    $region4: #{tpu_custom_call.1} parent=1 // pred_region
      %16 = vsyncadd [#allocation3], 0
      %s17 = sshll.u32 %s0, 4
      %s18 = int_to_ptr.hbm [resolvable:$true] %s17
      %s19 = sshll.u32 [#allocation2], 4
      %s20 = int_to_ptr.vmem [resolvable:$true] %s19
      %25 = dma.hbm_to_vmem [thread:$0]  %s18, 128, %s20, [#allocation3], 64, 64, 4
    $region5: #{tpu_custom_call.1} parent=1 // pred_fallthru
      _
    // Predicated region
    $region6: #{tpu_custom_call.1} parent=1 // pred_check
      _
    $region7: #{tpu_custom_call.1} parent=1 // pred_check_branch
      %27 = sbr.rel (0) target = $region9
    $region8: #{tpu_custom_call.1} parent=1 // pred_region
      %29 = vsyncadd [#allocation6], 0
      %s30 = sshll.u32 %s1, 4
      %s31 = int_to_ptr.hbm [resolvable:$true] %s30
      %s32 = sshll.u32 [#allocation5], 4
      %s33 = int_to_ptr.vmem [resolvable:$true] %s32
      %38 = dma.hbm_to_vmem [thread:$0]  %s31, 128, %s33, [#allocation6], 64, 64, 4
    $region9: #{tpu_custom_call.1} parent=1 // pred_fallthru
      _
    // Predicated region
    $region10: #{tpu_custom_call.1} parent=1 // pred_check
      _
    $region11: #{tpu_custom_call.1} parent=1 // pred_check_branch
      %40 = sbr.rel (0) target = $region13
    $region12: #{tpu_custom_call.1} parent=1 // pred_region
      %42 = vsyncadd [#allocation6], 0
      %s43 = sshll.u32 %s2, 4
      %s44 = int_to_ptr.hbm [resolvable:$true] %s43
      %s45 = sshll.u32 [#allocation7], 4
      %s46 = int_to_ptr.vmem [resolvable:$true] %s45
      %51 = dma.hbm_to_vmem [thread:$0]  %s44, 5120, %s46, [#allocation6], 64, 64, 4
    $region13: #{tpu_custom_call.1} parent=1 // pred_fallthru
      _
    // Predicated region
    $region14: #{tpu_custom_call.1} parent=1 // pred_check
      _
    $region15: #{tpu_custom_call.1} parent=1 // pred_check_branch
      %53 = sbr.rel (0) target = $region17
    $region16: #{tpu_custom_call.1} parent=1 // pred_region
      %55 = vsyncadd [#allocation9], 0
      %s57 = sshll.u32 %s3, 4
      %s58 = int_to_ptr.hbm [resolvable:$true] %s57
      %s59 = sshll.u32 [#allocation8], 4
      %s60 = int_to_ptr.vmem [resolvable:$true] %s59
      %62 = dma.hbm_to_vmem [thread:$0]  %s58, 128, %s60, [#allocation9]
    $region17: #{tpu_custom_call.1} parent=1 // pred_fallthru
      _
    // Predicated region
    $region18: #{tpu_custom_call.1} parent=1 // pred_check
      _
    $region19: #{tpu_custom_call.1} parent=1 // pred_check_branch
      %64 = sbr.rel (0) target = $region21
    $region20: #{tpu_custom_call.1} parent=1 // pred_region
      %66 = dma.done [#allocation3], 128
    $region21: #{tpu_custom_call.1} parent=1 // pred_fallthru
      _
    // Predicated region
    $region22: #{tpu_custom_call.1} parent=1 // pred_check
      _
    $region23: #{tpu_custom_call.1} parent=1 // pred_check_branch
      %68 = sbr.rel (0) target = $region25
    $region24: #{tpu_custom_call.1} parent=1 // pred_region
      %70 = dma.done [#allocation6], 128
    $region25: #{tpu_custom_call.1} parent=1 // pred_fallthru
      _
    // Predicated region
    $region26: #{tpu_custom_call.1} parent=1 // pred_check
      _
    $region27: #{tpu_custom_call.1} parent=1 // pred_check_branch
      %72 = sbr.rel (0) target = $region29
    $region28: #{tpu_custom_call.1} parent=1 // pred_region
      %74 = dma.done [#allocation6], 5120
    $region29: #{tpu_custom_call.1} parent=1 // pred_fallthru
      _
    // Predicated region
    $region30: #{tpu_custom_call.1} parent=1 // pred_check
      _
    $region31: #{tpu_custom_call.1} parent=1 // pred_check_branch
      %76 = sbr.rel (0) target = $region33
    $region32: #{tpu_custom_call.1} parent=1 // pred_region
      %78 = dma.done [#allocation9], 128
    $region33: #{tpu_custom_call.1} parent=1 // pred_fallthru
      _
    %v80 = vld [vmem:[#allocation2] sm:$0xf]
    %v81 = vld [vmem:[#allocation2 + $0x4] sm:$0xf]
    %v82 = vld [vmem:[#allocation5] sm:$0xf]
    %v83 = vld [vmem:[#allocation5 + $0x4] sm:$0xf]
    %v84 = vld [vmem:[#allocation8] sm:$0x1]
    %v85 = vperm.slane %v84, 0
    %v88 = vunpack.c.l.b16 %v80
    %v89 = vunpack.c.l.b16 %v81
    %v90 = vpack.c.b16 %v89, %v88
    %v93 = vunpack.c.l.b16 %v82
    %v94 = vunpack.c.l.b16 %v83
    %v95 = vpack.c.b16 %v94, %v93
    %vm97 = vcmask 130048
    %v99 = vsel %vm97, %v90, 0
    %101 = vmatpush.bf16.msra.mxu0 0
    %102 = vmatpush.bf16.msra.mxu0 0
    %103 = vmatpush.bf16.msra.mxu0 0
    %104 = vmatpush.bf16.msra.mxu0 0
    %105 = vmatpush.bf16.msra.mxu0 0
    %106 = vmatpush.bf16.msra.mxu0 0
    %107 = vmatpush.bf16.msra.mxu0 0
    %108 = vmatpush.bf16.msra.mxu0 %v95
    %109 = vmatmul.bf16.gmra.mxu0 %v99
    %v110 = vpop.f32.mrf.mxu0
    %v111 = vadd.f32 %v85, %v110
    %v112 = vpop.f32.mrf.mxu0
    %v113 = vadd.f32 %v85, %v112
    %114 = vdwg.mxu0
    %v115 = vmax.f32 %v111, 0.0
    %v116 = vmax.f32 %v113, 0.0
    %v117 = vpack.c.bf16 %v116, %v115
    %v118 = vld [vmem:[#allocation7] sm:$0xf]
    %v119 = vld [vmem:[#allocation7 + $0x4] sm:$0xf]
    %v120 = vld [vmem:[#allocation7 + $0x8] sm:$0xf]
    %v121 = vld [vmem:[#allocation7 + $0xc] sm:$0xf]
    %v122 = vld [vmem:[#allocation7 + $0x10] sm:$0xf]
    %v123 = vld [vmem:[#allocation7 + $0x14] sm:$0xf]
    %v124 = vld [vmem:[#allocation7 + $0x18] sm:$0xf]
    %v125 = vld [vmem:[#allocation7 + $0x1c] sm:$0xf]
    %v126 = vld [vmem:[#allocation7 + $0x20] sm:$0xf]
    %v127 = vld [vmem:[#allocation7 + $0x24] sm:$0xf]
    %v128 = vld [vmem:[#allocation7 + $0x28] sm:$0xf]
    %v129 = vld [vmem:[#allocation7 + $0x2c] sm:$0xf]
    %v130 = vld [vmem:[#allocation7 + $0x30] sm:$0xf]
    %v131 = vld [vmem:[#allocation7 + $0x34] sm:$0xf]
    %v132 = vld [vmem:[#allocation7 + $0x38] sm:$0xf]
    %v133 = vld [vmem:[#allocation7 + $0x3c] sm:$0xf]
    %v134 = vld [vmem:[#allocation8 + $0x1] sm:$0x1]
    %v135 = vperm.slane %v134, 0
    %v152 = vunpack.c.l.b16 %v118
    %v153 = vunpack.c.l.b16 %v119
    %v154 = vunpack.c.l.b16 %v120
    %v155 = vunpack.c.l.b16 %v121
    %v156 = vunpack.c.l.b16 %v122
    %v157 = vunpack.c.l.b16 %v123
    %v158 = vunpack.c.l.b16 %v124
    %v159 = vunpack.c.l.b16 %v125
    %v160 = vunpack.c.l.b16 %v126
    %v161 = vunpack.c.l.b16 %v127
    %v162 = vunpack.c.l.b16 %v128
    %v163 = vunpack.c.l.b16 %v129
    %v164 = vunpack.c.l.b16 %v130
    %v165 = vunpack.c.l.b16 %v131
    %v166 = vunpack.c.l.b16 %v132
    %v167 = vunpack.c.l.b16 %v133
    %v168 = vpack.c.b16 %v153, %v152
    %v169 = vpack.c.b16 %v155, %v154
    %v170 = vpack.c.b16 %v157, %v156
    %v171 = vpack.c.b16 %v159, %v158
    %v172 = vpack.c.b16 %v161, %v160
    %v173 = vpack.c.b16 %v163, %v162
    %v174 = vpack.c.b16 %v165, %v164
    %v175 = vpack.c.b16 %v167, %v166
    %184 = vmatpush.bf16.msra.mxu0 %v175
    %185 = vmatpush.bf16.msra.mxu0 %v174
    %186 = vmatpush.bf16.msra.mxu0 %v173
    %187 = vmatpush.bf16.msra.mxu0 %v172
    %188 = vmatpush.bf16.msra.mxu0 %v171
    %189 = vmatpush.bf16.msra.mxu0 %v170
    %190 = vmatpush.bf16.msra.mxu0 %v169
    %191 = vmatpush.bf16.msra.mxu0 %v168
    %192 = vmatmul.bf16.gmra.mxu0 %v117
    %v193 = vpop.f32.mrf.mxu0
    %v194 = vadd.f32 %v135, %v193
    %v195 = vpop.f32.mrf.mxu0
    %v196 = vadd.f32 %v135, %v195
    %197 = vdwg.mxu0
    %v198 = vmax.f32 %v194, 0.0
    %v199 = vmax.f32 %v196, 0.0
    %v200 = vpack.c.bf16 %v199, %v198
    %s201 = scalar_lea.vmem [#allocation7], 64
    %v202 = vld [vmem:[%s201] sm:$0xf]
    %v203 = vld [vmem:[%s201 + $0x4] sm:$0xf]
    %v204 = vld [vmem:[%s201 + $0x8] sm:$0xf]
    %v205 = vld [vmem:[%s201 + $0xc] sm:$0xf]
    %v206 = vld [vmem:[%s201 + $0x10] sm:$0xf]
    %v207 = vld [vmem:[%s201 + $0x14] sm:$0xf]
    %v208 = vld [vmem:[%s201 + $0x18] sm:$0xf]
    %v209 = vld [vmem:[%s201 + $0x1c] sm:$0xf]
    %v210 = vld [vmem:[%s201 + $0x20] sm:$0xf]
    %v211 = vld [vmem:[%s201 + $0x24] sm:$0xf]
    %v212 = vld [vmem:[%s201 + $0x28] sm:$0xf]
    %v213 = vld [vmem:[%s201 + $0x2c] sm:$0xf]
    %v214 = vld [vmem:[%s201 + $0x30] sm:$0xf]
    %v215 = vld [vmem:[%s201 + $0x34] sm:$0xf]
    %v216 = vld [vmem:[%s201 + $0x38] sm:$0xf]
    %v217 = vld [vmem:[%s201 + $0x3c] sm:$0xf]
    %v218 = vld [vmem:[#allocation8 + $0x2] sm:$0x1]
    %v219 = vperm.slane %v218, 0
    %v236 = vunpack.c.l.b16 %v202
    %v237 = vunpack.c.l.b16 %v203
    %v238 = vunpack.c.l.b16 %v204
    %v239 = vunpack.c.l.b16 %v205
    %v240 = vunpack.c.l.b16 %v206
    %v241 = vunpack.c.l.b16 %v207
    %v242 = vunpack.c.l.b16 %v208
    %v243 = vunpack.c.l.b16 %v209
    %v244 = vunpack.c.l.b16 %v210
    %v245 = vunpack.c.l.b16 %v211
    %v246 = vunpack.c.l.b16 %v212
    %v247 = vunpack.c.l.b16 %v213
    %v248 = vunpack.c.l.b16 %v214
    %v249 = vunpack.c.l.b16 %v215
    %v250 = vunpack.c.l.b16 %v216
    %v251 = vunpack.c.l.b16 %v217
    %v252 = vpack.c.b16 %v237, %v236
    %v253 = vpack.c.b16 %v239, %v238
    %v254 = vpack.c.b16 %v241, %v240
    %v255 = vpack.c.b16 %v243, %v242
    %v256 = vpack.c.b16 %v245, %v244
    %v257 = vpack.c.b16 %v247, %v246
    %v258 = vpack.c.b16 %v249, %v248
    %v259 = vpack.c.b16 %v251, %v250
    %268 = vmatpush.bf16.msra.mxu0 %v259
    %269 = vmatpush.bf16.msra.mxu0 %v258
    %270 = vmatpush.bf16.msra.mxu0 %v257
    %271 = vmatpush.bf16.msra.mxu0 %v256
    %272 = vmatpush.bf16.msra.mxu0 %v255
    %273 = vmatpush.bf16.msra.mxu0 %v254
    %274 = vmatpush.bf16.msra.mxu0 %v253
    %275 = vmatpush.bf16.msra.mxu0 %v252
    %276 = vmatmul.bf16.gmra.mxu0 %v200
    %v277 = vpop.f32.mrf.mxu0
    %v278 = vadd.f32 %v219, %v277
    %v279 = vpop.f32.mrf.mxu0
    %v280 = vadd.f32 %v219, %v279
    %281 = vdwg.mxu0
    %v282 = vmax.f32 %v278, 0.0
    %v283 = vmax.f32 %v280, 0.0
    %v284 = vpack.c.bf16 %v283, %v282
    %s285 = scalar_lea.vmem [#allocation7], 128
    %v286 = vld [vmem:[%s285] sm:$0xf]
    %v287 = vld [vmem:[%s285 + $0x4] sm:$0xf]
    %v288 = vld [vmem:[%s285 + $0x8] sm:$0xf]
    %v289 = vld [vmem:[%s285 + $0xc] sm:$0xf]
    %v290 = vld [vmem:[%s285 + $0x10] sm:$0xf]
    %v291 = vld [vmem:[%s285 + $0x14] sm:$0xf]
    %v292 = vld [vmem:[%s285 + $0x18] sm:$0xf]
    %v293 = vld [vmem:[%s285 + $0x1c] sm:$0xf]
    %v294 = vld [vmem:[%s285 + $0x20] sm:$0xf]
    %v295 = vld [vmem:[%s285 + $0x24] sm:$0xf]
    %v296 = vld [vmem:[%s285 + $0x28] sm:$0xf]
    %v297 = vld [vmem:[%s285 + $0x2c] sm:$0xf]
    %v298 = vld [vmem:[%s285 + $0x30] sm:$0xf]
    %v299 = vld [vmem:[%s285 + $0x34] sm:$0xf]
    %v300 = vld [vmem:[%s285 + $0x38] sm:$0xf]
    %v301 = vld [vmem:[%s285 + $0x3c] sm:$0xf]
    %v302 = vld [vmem:[#allocation8 + $0x3] sm:$0x1]
    %v303 = vperm.slane %v302, 0
    %v320 = vunpack.c.l.b16 %v286
    %v321 = vunpack.c.l.b16 %v287
    %v322 = vunpack.c.l.b16 %v288
    %v323 = vunpack.c.l.b16 %v289
    %v324 = vunpack.c.l.b16 %v290
    %v325 = vunpack.c.l.b16 %v291
    %v326 = vunpack.c.l.b16 %v292
    %v327 = vunpack.c.l.b16 %v293
    %v328 = vunpack.c.l.b16 %v294
    %v329 = vunpack.c.l.b16 %v295
    %v330 = vunpack.c.l.b16 %v296
    %v331 = vunpack.c.l.b16 %v297
    %v332 = vunpack.c.l.b16 %v298
    %v333 = vunpack.c.l.b16 %v299
    %v334 = vunpack.c.l.b16 %v300
    %v335 = vunpack.c.l.b16 %v301
    %v336 = vpack.c.b16 %v321, %v320
    %v337 = vpack.c.b16 %v323, %v322
    %v338 = vpack.c.b16 %v325, %v324
    %v339 = vpack.c.b16 %v327, %v326
    %v340 = vpack.c.b16 %v329, %v328
    %v341 = vpack.c.b16 %v331, %v330
    %v342 = vpack.c.b16 %v333, %v332
    %v343 = vpack.c.b16 %v335, %v334
    %352 = vmatpush.bf16.msra.mxu0 %v343
    %353 = vmatpush.bf16.msra.mxu0 %v342
    %354 = vmatpush.bf16.msra.mxu0 %v341
    %355 = vmatpush.bf16.msra.mxu0 %v340
    %356 = vmatpush.bf16.msra.mxu0 %v339
    %357 = vmatpush.bf16.msra.mxu0 %v338
    %358 = vmatpush.bf16.msra.mxu0 %v337
    %359 = vmatpush.bf16.msra.mxu0 %v336
    %360 = vmatmul.bf16.gmra.mxu0 %v284
    %v361 = vpop.f32.mrf.mxu0
    %v362 = vadd.f32 %v303, %v361
    %v363 = vpop.f32.mrf.mxu0
    %v364 = vadd.f32 %v303, %v363
    %365 = vdwg.mxu0
    %v366 = vmax.f32 %v362, 0.0
    %v367 = vmax.f32 %v364, 0.0
    %v368 = vpack.c.bf16 %v367, %v366
    %s369 = scalar_lea.vmem [#allocation7], 192
    %v370 = vld [vmem:[%s369] sm:$0xf]
    %v371 = vld [vmem:[%s369 + $0x4] sm:$0xf]
    %v372 = vld [vmem:[%s369 + $0x8] sm:$0xf]
    %v373 = vld [vmem:[%s369 + $0xc] sm:$0xf]
    %v374 = vld [vmem:[%s369 + $0x10] sm:$0xf]
    %v375 = vld [vmem:[%s369 + $0x14] sm:$0xf]
    %v376 = vld [vmem:[%s369 + $0x18] sm:$0xf]
    %v377 = vld [vmem:[%s369 + $0x1c] sm:$0xf]
    %v378 = vld [vmem:[%s369 + $0x20] sm:$0xf]
    %v379 = vld [vmem:[%s369 + $0x24] sm:$0xf]
    %v380 = vld [vmem:[%s369 + $0x28] sm:$0xf]
    %v381 = vld [vmem:[%s369 + $0x2c] sm:$0xf]
    %v382 = vld [vmem:[%s369 + $0x30] sm:$0xf]
    %v383 = vld [vmem:[%s369 + $0x34] sm:$0xf]
    %v384 = vld [vmem:[%s369 + $0x38] sm:$0xf]
    %v385 = vld [vmem:[%s369 + $0x3c] sm:$0xf]
    %v386 = vld [vmem:[#allocation8 + $0x4] sm:$0x1]
    %v387 = vperm.slane %v386, 0
    %v404 = vunpack.c.l.b16 %v370
    %v405 = vunpack.c.l.b16 %v371
    %v406 = vunpack.c.l.b16 %v372
    %v407 = vunpack.c.l.b16 %v373
    %v408 = vunpack.c.l.b16 %v374
    %v409 = vunpack.c.l.b16 %v375
    %v410 = vunpack.c.l.b16 %v376
    %v411 = vunpack.c.l.b16 %v377
    %v412 = vunpack.c.l.b16 %v378
    %v413 = vunpack.c.l.b16 %v379
    %v414 = vunpack.c.l.b16 %v380
    %v415 = vunpack.c.l.b16 %v381
    %v416 = vunpack.c.l.b16 %v382
    %v417 = vunpack.c.l.b16 %v383
    %v418 = vunpack.c.l.b16 %v384
    %v419 = vunpack.c.l.b16 %v385
    %v420 = vpack.c.b16 %v405, %v404
    %v421 = vpack.c.b16 %v407, %v406
    %v422 = vpack.c.b16 %v409, %v408
    %v423 = vpack.c.b16 %v411, %v410
    %v424 = vpack.c.b16 %v413, %v412
    %v425 = vpack.c.b16 %v415, %v414
    %v426 = vpack.c.b16 %v417, %v416
    %v427 = vpack.c.b16 %v419, %v418
    %436 = vmatpush.bf16.msra.mxu0 %v427
    %437 = vmatpush.bf16.msra.mxu0 %v426
    %438 = vmatpush.bf16.msra.mxu0 %v425
    %439 = vmatpush.bf16.msra.mxu0 %v424
    %440 = vmatpush.bf16.msra.mxu0 %v423
    %441 = vmatpush.bf16.msra.mxu0 %v422
    %442 = vmatpush.bf16.msra.mxu0 %v421
    %443 = vmatpush.bf16.msra.mxu0 %v420
    %444 = vmatmul.bf16.gmra.mxu0 %v368
    %v445 = vpop.f32.mrf.mxu0
    %v446 = vadd.f32 %v387, %v445
    %v447 = vpop.f32.mrf.mxu0
    %v448 = vadd.f32 %v387, %v447
    %449 = vdwg.mxu0
    %v450 = vmax.f32 %v446, 0.0
    %v451 = vmax.f32 %v448, 0.0
    %v452 = vpack.c.bf16 %v451, %v450
    %s453 = scalar_lea.vmem [#allocation7], 256
    %v454 = vld [vmem:[%s453] sm:$0xf]
    %v455 = vld [vmem:[%s453 + $0x4] sm:$0xf]
    %v456 = vld [vmem:[%s453 + $0x8] sm:$0xf]
    %v457 = vld [vmem:[%s453 + $0xc] sm:$0xf]
    %v458 = vld [vmem:[%s453 + $0x10] sm:$0xf]
    %v459 = vld [vmem:[%s453 + $0x14] sm:$0xf]
    %v460 = vld [vmem:[%s453 + $0x18] sm:$0xf]
    %v461 = vld [vmem:[%s453 + $0x1c] sm:$0xf]
    %v462 = vld [vmem:[%s453 + $0x20] sm:$0xf]
    %v463 = vld [vmem:[%s453 + $0x24] sm:$0xf]
    %v464 = vld [vmem:[%s453 + $0x28] sm:$0xf]
    %v465 = vld [vmem:[%s453 + $0x2c] sm:$0xf]
    %v466 = vld [vmem:[%s453 + $0x30] sm:$0xf]
    %v467 = vld [vmem:[%s453 + $0x34] sm:$0xf]
    %v468 = vld [vmem:[%s453 + $0x38] sm:$0xf]
    %v469 = vld [vmem:[%s453 + $0x3c] sm:$0xf]
    %v470 = vld [vmem:[#allocation8 + $0x5] sm:$0x1]
    %v471 = vperm.slane %v470, 0
    %v488 = vunpack.c.l.b16 %v454
    %v489 = vunpack.c.l.b16 %v455
    %v490 = vunpack.c.l.b16 %v456
    %v491 = vunpack.c.l.b16 %v457
    %v492 = vunpack.c.l.b16 %v458
    %v493 = vunpack.c.l.b16 %v459
    %v494 = vunpack.c.l.b16 %v460
    %v495 = vunpack.c.l.b16 %v461
    %v496 = vunpack.c.l.b16 %v462
    %v497 = vunpack.c.l.b16 %v463
    %v498 = vunpack.c.l.b16 %v464
    %v499 = vunpack.c.l.b16 %v465
    %v500 = vunpack.c.l.b16 %v466
    %v501 = vunpack.c.l.b16 %v467
    %v502 = vunpack.c.l.b16 %v468
    %v503 = vunpack.c.l.b16 %v469
    %v504 = vpack.c.b16 %v489, %v488
    %v505 = vpack.c.b16 %v491, %v490
    %v506 = vpack.c.b16 %v493, %v492
    %v507 = vpack.c.b16 %v495, %v494
    %v508 = vpack.c.b16 %v497, %v496
    %v509 = vpack.c.b16 %v499, %v498
    %v510 = vpack.c.b16 %v501, %v500
    %v511 = vpack.c.b16 %v503, %v502
    %520 = vmatpush.bf16.msra.mxu0 %v511
    %521 = vmatpush.bf16.msra.mxu0 %v510
    %522 = vmatpush.bf16.msra.mxu0 %v509
    %523 = vmatpush.bf16.msra.mxu0 %v508
    %524 = vmatpush.bf16.msra.mxu0 %v507
    %525 = vmatpush.bf16.msra.mxu0 %v506
    %526 = vmatpush.bf16.msra.mxu0 %v505
    %527 = vmatpush.bf16.msra.mxu0 %v504
    %528 = vmatmul.bf16.gmra.mxu0 %v452
    %v529 = vpop.f32.mrf.mxu0
    %v530 = vadd.f32 %v471, %v529
    %v531 = vpop.f32.mrf.mxu0
    %v532 = vadd.f32 %v471, %v531
    %533 = vdwg.mxu0
    %v534 = vpack.c.bf16 %v530, %v530
    %v535 = vpack.c.bf16 %v532, %v532
    %536 = vst [vmem:[#allocation10] sm:$0xf] %v534
    %537 = vst [vmem:[#allocation10 + $0x4] sm:$0xf] %v535
    // Predicated region
    $region34: #{tpu_custom_call.1} parent=1 // pred_check
      _
    $region35: #{tpu_custom_call.1} parent=1 // pred_check_branch
      %539 = sbr.rel (0) target = $region37
    $region36: #{tpu_custom_call.1} parent=1 // pred_region
      %541 = vsyncadd [#allocation4], 0
      %s542 = sshll.u32 [#allocation10], 4
      %s543 = int_to_ptr.vmem [resolvable:$true] %s542
      %s544 = sshll.u32 %s4, 4
      %s545 = int_to_ptr.hbm [resolvable:$true] %s544
      %550 = dma.vmem_to_hbm [thread:$0]  %s543, 128, %s545, [#allocation4], 64, 64, 4
    $region37: #{tpu_custom_call.1} parent=1 // pred_fallthru
      _
    // Predicated region
    $region38: #{tpu_custom_call.1} parent=1 // pred_check
      _
    $region39: #{tpu_custom_call.1} parent=1 // pred_check_branch
      %552 = sbr.rel (0) target = $region41
    $region40: #{tpu_custom_call.1} parent=1 // pred_region
      %554 = dma.done [#allocation4], 128
    $region41: #{tpu_custom_call.1} parent=1 // pred_fallthru
      _
    %555 = vsyncpa [#allocation3], 1
    %556 = vsyncpa [#allocation6], 1
    %557 = vsyncpa [#allocation9], 1
    %558 = vsyncpa [#allocation4], 1

</llo_original>
